<compile_context>
chip_gen: v5e
topology: v5e:2x2
jax: 0.10.0
libtpu: 0.0.40
codegen_flags: <defaults>
</compile_context>

<pallas_src>
import math

import numpy as np
import jax
import jax.numpy as jnp
from jax.experimental import pallas as pl
from jax.experimental.pallas import tpu as pltpu


# ----------------------------------------------------------------------------
# blur-kernel helpers (mirror the PyTorch make_kernel / Upsample module)
# ----------------------------------------------------------------------------
def make_kernel(k):
    """Same as the PyTorch make_kernel: normalized 2-D blur kernel."""
    k = np.asarray(k, dtype=np.float64)
    if k.ndim == 1:
        k = k[None, :] * k[:, None]
    k = k / k.sum()
    return k.astype(np.float32)


def _upsample_matrix(n_in, factor, blur_1d):
    """1-D upfirdn (up=factor, StyleGAN2 Upsample padding) as a dense banded matrix.

    out = M @ x  ==  upfirdn1d(x, k1d/sum(k1d)*factor, up=factor, pad=(pad0, pad1)).
    Boundary zeros are baked into M, so no input padding is needed.
    """
    k1 = np.asarray(blur_1d, dtype=np.float64)
    assert k1.ndim == 1, "ToRGBA uses a separable 1-D blur kernel"
    g = k1 / k1.sum() * factor            # per-axis taps (factor**2 gain split per axis)
    gf = g[::-1]                          # upfirdn2d correlates with the flipped kernel
    kh = gf.shape[0]
    p = kh - factor
    pad0 = (p + 1) // 2 + factor - 1      # Upsample module's padding
    pad1 = p // 2
    n_out = factor * n_in + pad0 + pad1 - kh + 1
    m = np.zeros((n_out, n_in), dtype=np.float32)
    for j in range(n_out):
        for i in range(n_in):
            t = factor * i + pad0 - j
            if 0 <= t < kh:
                m[j, i] = gf[t]
    return m


# ----------------------------------------------------------------------------
# VMEM budget / tile selection (per-generation)
# ----------------------------------------------------------------------------
_FALLBACK_VMEM = 64 * 1024 * 1024       # conservative (v7x physical) if query fails


def _vmem_capacity_bytes():
    try:
        info = pltpu.get_tpu_info()
        for name in ("vmem_capacity_bytes", "vmem_size_bytes", "vmem_bytes"):
            v = getattr(info, name, None)
            if v:
                return int(v)
    except Exception:
        pass
    return _FALLBACK_VMEM


def _vmem_budget_bytes():
    # ~25% headroom for Mosaic-internal scratch:
    # 128 MiB (v5e/v6e) -> 96 MiB, 64 MiB (v7x) -> 48 MiB.
    return (_vmem_capacity_bytes() * 3) // 4


def _pick_lane_tile(hw, bytes_per_lane, budget_bytes, want_multi):
    """Largest lane-dense (multiple-of-128) spatial tile fitting the VMEM budget."""
    if hw <= 128:
        return hw                                           # block == full dim
    t = (budget_bytes // max(bytes_per_lane, 1)) // 128 * 128
    t = max(t, 128)
    if want_multi:                                          # >=2 grid points (megacore)
        t = min(t, max(128, (hw // 2) // 128 * 128))
    t = min(t, ((hw + 127) // 128) * 128)
    if hw % t:                                              # prefer an exact divisor
        d = t
        while d > 128 and hw % d:
            d -= 128
        if hw % d == 0:
            t = d
    return t


def _pick_row_tile(h, bytes_per_row, fixed_bytes, budget_bytes, want_multi):
    """Output-row tile (multiple of 8) for the upsample kernel."""
    if h <= 8:
        return h
    avail = max(budget_bytes - fixed_bytes, 8 * bytes_per_row)
    th = avail // max(bytes_per_row, 1)
    if want_multi:
        th = min(th, h // 2)
    th = min(th, h)
    if th >= h:
        return h
    th = max(8, (th // 8) * 8)
    d = th
    while d > 8 and h % d:                                  # prefer an exact divisor
        d -= 8
    if h % d == 0:
        th = d
    return th


# ----------------------------------------------------------------------------
# Pallas kernels
# ----------------------------------------------------------------------------
def _modconv_kernel(w_ref, b_ref, x_ref, o_ref):
    """Per-(sample, spatial-tile): out = w @ x + b.

    w_ref: (O, C)  per-sample modulated 1x1 weights, in x's dtype (native MXU path)
    b_ref: (O, 1)  f32 output bias
    x_ref: (C, T)  native-dtype activations, T = lane-dense spatial tile
    o_ref: (O, T)
    """
    acc = jnp.dot(w_ref[...], x_ref[...], preferred_element_type=jnp.float32)
    o_ref[...] = (acc + b_ref[...]).astype(o_ref.dtype)


def _upsample_add_kernel(a_ref, b_ref, skip_ref, base_ref, o_ref):
    """Per (sample, output-row-tile): o[c] = (A_rows @ skip[c]) @ B + base[c].

    a_ref   : (TH, Hs)    row block of the banded H-upsample matrix (halo baked in)
    b_ref   : (Ws, W)     banded W-upsample matrix
    skip_ref: (O, Hs, Ws) whole skip for this sample (resident across row tiles)
    base_ref, o_ref: (O, TH, W)
    """
    a = a_ref[...]
    b = b_ref[...]
    for c in range(skip_ref.shape[0]):            # O = 4 RGBA channels, static unroll
        rows = jnp.dot(a, skip_ref[c].astype(a.dtype),
                       preferred_element_type=jnp.float32)           # (TH, Ws)
        up = jnp.dot(rows.astype(b.dtype), b,
                     preferred_element_type=jnp.float32)             # (TH, W)
        o_ref[c] = (up + base_ref[c].astype(jnp.float32)).astype(o_ref.dtype)


# ----------------------------------------------------------------------------
# wrappers
# ----------------------------------------------------------------------------
def _modulated_conv_bias(x, w_mod, bias, vmem_budget):
    """1x1 per-sample (grouped) conv:  out[n] = w_mod[n] @ x[n] + bias."""
    N, C, H, W = x.shape
    O = w_mod.shape[1]
    HW = H * W
    x_item = x.dtype.itemsize

    # double-buffered x block + out block dominate the per-step VMEM cost
    bytes_per_lane = 2 * (C + O) * x_item
    block_budget = (vmem_budget * 9) // 10
    T = _pick_lane_tile(HW, bytes_per_lane, block_budget, want_multi=(N == 1))
    grid = (N, pl.cdiv(HW, T))

    x2 = x.reshape(N, C, HW)                      # free reshape (adjacent dims)
    w2 = w_mod.astype(x.dtype)                    # native-dtype MXU matmul (no in-kernel cast)
    b2 = bias.reshape(O, 1).astype(jnp.float32)

    out = pl.pallas_call(
        _modconv_kernel,
        out_shape=jax.ShapeDtypeStruct((N, O, HW), x.dtype),
        grid=grid,
        in_specs=[
            pl.BlockSpec((None, O, C), lambda n, t: (n, 0, 0)),
            pl.BlockSpec((O, 1), lambda n, t: (0, 0)),
            pl.BlockSpec((None, C, T), lambda n, t: (n, 0, t)),
        ],
        out_specs=pl.BlockSpec((None, O, T), lambda n, t: (n, 0, t)),
        compiler_params=pltpu.CompilerParams(
            dimension_semantics=("parallel", "parallel"),
            vmem_limit_bytes=int(vmem_budget)),
        cost_estimate=pl.CostEstimate(
            flops=2 * N * O * C * HW,
            transcendentals=0,
            bytes_accessed=(N * C * HW + N * O * HW) * x_item
                           + N * O * C * x_item + O * 4),
    )(w2, b2, x2)
    return out.reshape(N, O, H, W)


def _upsample_add(skip, base, blur_kernel, vmem_budget, matmul_dtype=None):
    """base + upfirdn2d(skip, make_kernel(blur)*4, up=2), as banded A @ skip @ B matmuls."""
    N, O, Hs, Ws = skip.shape
    _, _, H, W = base.shape
    factor = 2

    if matmul_dtype is None:
        # bf16 MXU fast path (v5e/v6e) when activations are already bf16; the
        # taps 0.25/0.75 are exact in bf16.  Full f32 when activations are f32.
        matmul_dtype = jnp.bfloat16 if skip.dtype == jnp.bfloat16 else jnp.float32

    a_np = _upsample_matrix(Hs, factor, blur_kernel)          # (H, Hs)
    b_np = _upsample_matrix(Ws, factor, blur_kernel).T        # (Ws, W)
    assert a_np.shape == (H, Hs) and b_np.shape == (Ws, W)
    a = jnp.asarray(a_np, dtype=matmul_dtype)
    b = jnp.asarray(b_np, dtype=matmul_dtype)

    s_item = skip.dtype.itemsize
    o_item = base.dtype.itemsize
    m_item = np.dtype(matmul_dtype).itemsize
    bytes_per_row = 2 * (Hs * m_item + 2 * O * W * o_item)    # A row + base + out rows (x2 buf)
    fixed_bytes = 2 * (O * Hs * Ws * s_item + Ws * W * m_item)
    block_budget = (vmem_budget * 9) // 10
    TH = _pick_row_tile(H, bytes_per_row, fixed_bytes, block_budget, want_multi=(N == 1))
    grid = (N, pl.cdiv(H, TH))

    return pl.pallas_call(
        _upsample_add_kernel,
        out_shape=jax.ShapeDtypeStruct((N, O, H, W), base.dtype),
        grid=grid,
        in_specs=[
            pl.BlockSpec((TH, Hs), lambda n, h: (h, 0)),
            pl.BlockSpec((Ws, W), lambda n, h: (0, 0)),
            pl.BlockSpec((None, O, Hs, Ws), lambda n, h: (n, 0, 0, 0)),
            pl.BlockSpec((None, O, TH, W), lambda n, h: (n, 0, h, 0)),
        ],
        out_specs=pl.BlockSpec((None, O, TH, W), lambda n, h: (n, 0, h, 0)),
        compiler_params=pltpu.CompilerParams(
            dimension_semantics=("parallel", "parallel"),
            vmem_limit_bytes=int(vmem_budget)),
        cost_estimate=pl.CostEstimate(
            flops=2 * N * O * H * Ws * (Hs + W),
            transcendentals=0,
            bytes_accessed=N * O * (Hs * Ws * s_item + 2 * H * W * o_item)
                           + (H * Hs + Ws * W) * m_item),
    )(a, b, skip, base)


def to_rgba_forward(x, style, params, skip=None, blur_kernel=(1, 3, 3, 1),
                    upsample_matmul_dtype=None):
    """ToRGBA.forward: modulated 1x1 conv (no demod) + bias (+ 2x-upsampled skip)."""
    N, C, H, W = x.shape
    conv_w = params["conv_weight"]                         # (1, O, C, 1, 1)
    O = conv_w.shape[1]
    mod_w = params["mod_weight"].astype(jnp.float32)       # (C, S)  EqualLinear.weight
    mod_b = params["mod_bias"].astype(jnp.float32)         # (C,)    EqualLinear.bias (init 1)
    S = mod_w.shape[1]

    # EqualLinear style modulation + per-sample weight modulation: O(N*S*C) flops
    # on tiny operands -> plain XLA; the result feeds the lane-dense Pallas matmul.
    s = style.astype(jnp.float32) @ mod_w.T * (1.0 / math.sqrt(S)) + mod_b   # (N, C)
    w_mod = (1.0 / math.sqrt(C)) * conv_w.reshape(O, C).astype(jnp.float32)[None] \
        * s[:, None, :]                                                      # (N, O, C)

    vmem_budget = _vmem_budget_bytes()
    out = _modulated_conv_bias(x, w_mod, params["bias"], vmem_budget)
    if skip is None:
        return out
    assert skip.shape[1] == O and skip.shape[2] * 2 == H and skip.shape[3] * 2 == W
    return _upsample_add(skip, out, blur_kernel, vmem_budget,
                         matmul_dtype=upsample_matmul_dtype)


# ----------------------------------------------------------------------------
# NumPy / pure-JAX references (mirror the PyTorch module exactly)
# ----------------------------------------------------------------------------
def _upfirdn2d_np(x, k2d, up, pad):
    """Tiny NumPy mirror of upfirdn2d_native for one 2-D plane (validation only)."""
    h, w = x.shape
    z = np.zeros((h, up, w, up), np.float64)
    z[:, 0, :, 0] = x
    z = z.reshape(h * up, w * up)
    z = np.pad(z, ((pad[0], pad[1]), (pad[0], pad[1])))
    kf = np.asarray(k2d, np.float64)[::-1, ::-1]
    kh, kw = kf.shape
    oh, ow = z.shape[0] - kh + 1, z.shape[1] - kw + 1
    out = np.zeros((oh, ow))
    for i in range(oh):
        for j in range(ow):
            out[i, j] = (z[i:i + kh, j:j + kw] * kf).sum()
    return out


def _validate_upsample_matrices(blur_kernel=(1, 3, 3, 1), factor=2):
    """Exact check: A @ s @ B == upfirdn2d(s, make_kernel(k)*factor^2, up=factor, pad)."""
    rng = np.random.RandomState(0)
    hs, ws = 6, 5                                  # deliberately small & non-square
    s = rng.randn(hs, ws)
    k2d = make_kernel(blur_kernel).astype(np.float64) * factor ** 2
    p = k2d.shape[0] - factor
    pad = ((p + 1) // 2 + factor - 1, p // 2)
    ref = _upfirdn2d_np(s, k2d, factor, pad)
    a = _upsample_matrix(hs, factor, blur_kernel).astype(np.float64)
    b = _upsample_matrix(ws, factor, blur_kernel).T.astype(np.float64)
    np.testing.assert_allclose(a @ s @ b, ref, rtol=1e-6, atol=1e-6)


def _upfirdn2d_ref(x, k2d, up, pad):
    """JAX mirror of upfirdn2d_native: zero-stuff -> pad -> conv with flipped kernel."""
    N, C, H, W = x.shape
    kh, kw = k2d.shape
    z = jnp.zeros((N, C, H, up, W, up), x.dtype).at[:, :, :, 0, :, 0].set(x)
    z = z.reshape(N, C, H * up, W * up)
    z = jnp.pad(z, ((0, 0), (0, 0), (pad[0], pad[1]), (pad[0], pad[1])))
    w = jnp.broadcast_to(jnp.flip(k2d, (0, 1))[None, None], (C, 1, kh, kw))
    return jax.lax.conv_general_dilated(
        z, w, window_strides=(1, 1), padding="VALID",
        dimension_numbers=("NCHW", "OIHW", "NCHW"), feature_group_count=C,
        precision=jax.lax.Precision.HIGHEST)


def _to_rgba_reference(x, style, params, skip, blur_kernel=(1, 3, 3, 1)):
    N, C, H, W = x.shape
    conv_w = params["conv_weight"]
    O = conv_w.shape[1]
    mod_w = params["mod_weight"].astype(jnp.float32)
    mod_b = params["mod_bias"].astype(jnp.float32)
    S = mod_w.shape[1]
    s = style.astype(jnp.float32) @ mod_w.T * (1.0 / math.sqrt(S)) + mod_b
    w = (1.0 / math.sqrt(C)) * conv_w.reshape(O, C).astype(jnp.float32)[None] * s[:, None, :]
    out = jnp.einsum("noc,nchw->nohw", w, x.astype(jnp.float32),
                     precision=jax.lax.Precision.HIGHEST)
    out = out + params["bias"].reshape(1, O, 1, 1).astype(jnp.float32)
    if skip is not None:
        factor = 2
        k2d = jnp.asarray(make_kernel(blur_kernel)) * (factor ** 2)
        kh = k2d.shape[0]
        p = kh - factor
        pad = ((p + 1) // 2 + factor - 1, p // 2)
        out = out + _upfirdn2d_ref(skip.astype(jnp.float32), k2d, factor, pad)
    return out


# ----------------------------------------------------------------------------
if __name__ == "__main__":
    # Exact structural validation of the banded upsample matrices (NumPy only).
    _validate_upsample_matrices()

    key = jax.random.PRNGKey(0)
    kx, ks, kk, kw1, kw2, kb = jax.random.split(key, 6)

    N, C, H, W = 2, 32, 16, 16      # batch, in_channels, spatial
    S, O = 16, 4                    # style_dim, RGBA output channels

    x = jax.random.normal(kx, (N, C, H, W), dtype=jnp.float32)
    style = jax.random.normal(ks, (N, S), dtype=jnp.float32)
    skip = jax.random.normal(kk, (N, O, H // 2, W // 2), dtype=jnp.float32)

    params = {
        "mod_weight": jax.random.normal(kw1, (C, S), dtype=jnp.float32),   # EqualLinear.weight
        "mod_bias": jnp.ones((C,), dtype=jnp.float32),                     # bias_init = 1
        "conv_weight": jax.random.normal(kw2, (1, O, C, 1, 1), dtype=jnp.float32),
        "bias": 0.5 * jax.random.normal(kb, (1, O, 1, 1), dtype=jnp.float32),
    }

    ref = jax.block_until_ready(_to_rgba_reference(x, style, params, skip))
    ref_ns = jax.block_until_ready(_to_rgba_reference(x, style, params, None))

    # f32 path, with and without skip.  Tolerance allows for MXU f32 multi-pass
    # rounding; structural (tap/padding) correctness is covered exactly by
    # _validate_upsample_matrices above.
    out = jax.block_until_ready(to_rgba_forward(x, style, params, skip=skip))
    assert out.shape == (N, O, H, W), out.shape
    np.testing.assert_allclose(np.asarray(out), np.asarray(ref), rtol=1e-2, atol=1e-2)

    out_ns = jax.block_until_ready(to_rgba_forward(x, style, params, skip=None))
    np.testing.assert_allclose(np.asarray(out_ns), np.asarray(ref_ns), rtol=1e-2, atol=1e-2)

    # bf16 fast path: native-dtype MXU conv matmul + bf16 banded upsample
    # (skip activations lose mantissa bits -> looser tolerance, documented).
    xb, skb = x.astype(jnp.bfloat16), skip.astype(jnp.bfloat16)
    out_bf = jax.block_until_ready(to_rgba_forward(xb, style, params, skip=skb))
    np.testing.assert_allclose(np.asarray(out_bf.astype(jnp.float32)), np.asarray(ref),
                               rtol=5e-2, atol=5e-2)

    print("KERNEL_OK")
</pallas_src>

<mosaic_0001>
module attributes {stable_mosaic.version = 11 : i64} {
  func.func @_modconv_kernel(%arg0: i32, %arg1: i32, %arg2: memref<1x4x32xf32, #tpu.memory_space<vmem>>, %arg3: memref<4x1xf32, #tpu.memory_space<vmem>>, %arg4: memref<1x32x256xf32, #tpu.memory_space<vmem>>, %arg5: memref<1x4x256xf32, #tpu.memory_space<vmem>>) attributes {dimension_semantics = [#tpu.dimension_semantics<parallel>, #tpu.dimension_semantics<parallel>], iteration_bounds = array<i64: 2, 1>, scalar_prefetch = 0 : i64, scratch_operands = 0 : i64, tpu.core_type = #tpu.core_type<tc>, window_params = [{transform_indices = @transform_0, window_bounds = array<i64: 1, 4, 32>}, {pipeline_mode = #tpu.pipeline_mode<synchronous>, transform_indices = @transform_1, window_bounds = array<i64: 4, 1>}, {transform_indices = @transform_2, window_bounds = array<i64: 1, 32, 256>}, {transform_indices = @transform_3, window_bounds = array<i64: 1, 4, 256>}]} {
    %c0 = arith.constant 0 : index
    %c0_0 = arith.constant 0 : index
    %c0_1 = arith.constant 0 : index
    %0 = vector.load %arg2[%c0, %c0_0, %c0_1] : memref<1x4x32xf32, #tpu.memory_space<vmem>>, vector<1x4x32xf32>
    %1 = vector.shape_cast %0 : vector<1x4x32xf32> to vector<4x32xf32>
    %c0_2 = arith.constant 0 : index
    %c0_3 = arith.constant 0 : index
    %c0_4 = arith.constant 0 : index
    %2 = vector.load %arg4[%c0_2, %c0_3, %c0_4] : memref<1x32x256xf32, #tpu.memory_space<vmem>>, vector<1x32x256xf32>
    %3 = vector.shape_cast %2 : vector<1x32x256xf32> to vector<32x256xf32>
    %cst = arith.constant dense<0.000000e+00> : vector<4x256xf32>
    %4 = tpu.matmul %1, %3, %cst {dimension_numbers = #tpu.dot_dimension_numbers<[1], [0], [0], [1], [0, 0, 1, 1], [], []>} : vector<4x32xf32>, vector<32x256xf32>, vector<4x256xf32> -> vector<4x256xf32>
    %c0_5 = arith.constant 0 : index
    %c0_6 = arith.constant 0 : index
    %5 = vector.load %arg3[%c0_5, %c0_6] : memref<4x1xf32, #tpu.memory_space<vmem>>, vector<4x1xf32>
    %6 = vector.broadcast %5 : vector<4x1xf32> to vector<4x256xf32>
    %7 = arith.addf %4, %6 : vector<4x256xf32>
    %c0_7 = arith.constant 0 : index
    %c0_8 = arith.constant 0 : index
    %c0_9 = arith.constant 0 : index
    %8 = vector.load %arg5[%c0_7, %c0_8, %c0_9] : memref<1x4x256xf32, #tpu.memory_space<vmem>>, vector<1x4x256xf32>
    %9 = vector.shape_cast %8 : vector<1x4x256xf32> to vector<4x256xf32>
    %10 = vector.shape_cast %7 : vector<4x256xf32> to vector<1x4x256xf32>
    tpu.vector_store %arg5[%c0_7, %c0_8, %c0_9], %10 {strides = array<i32>} : memref<1x4x256xf32, #tpu.memory_space<vmem>>, vector<1x4x256xf32>,
    return
  }
  func.func @transform_0(%arg0: i32, %arg1: i32) -> (i32, i32, i32) {
    %c0_i32 = arith.constant 0 : i32
    %c0_i32_0 = arith.constant 0 : i32
    %c0_i32_1 = arith.constant 0 : i32
    return %arg0, %c0_i32, %c0_i32_0 : i32, i32, i32
  }
  func.func @transform_1(%arg0: i32, %arg1: i32) -> (i32, i32) {
    %c0_i32 = arith.constant 0 : i32
    %c0_i32_0 = arith.constant 0 : i32
    %c0_i32_1 = arith.constant 0 : i32
    return %c0_i32, %c0_i32_0 : i32, i32
  }
  func.func @transform_2(%arg0: i32, %arg1: i32) -> (i32, i32, i32) {
    %c0_i32 = arith.constant 0 : i32
    %c0_i32_0 = arith.constant 0 : i32
    return %arg0, %c0_i32, %arg1 : i32, i32, i32
  }
  func.func @transform_3(%arg0: i32, %arg1: i32) -> (i32, i32, i32) {
    %c0_i32 = arith.constant 0 : i32
    %c0_i32_0 = arith.constant 0 : i32
    return %arg0, %c0_i32, %arg1 : i32, i32, i32
  }
}

</mosaic_0001>

<llo_original>
// kernel: tpu_custom_call.1
$region0: #{tpu_custom_call.1}
  #allocation0 [shape = 'u32[]', space=smem, size = 0x4, offset = 0x4, fixed_abs, tag = 'smem constant byte address 0x4 - core index']
  #allocation1 [shape = 'u32[72,128]{1,0:T(1,128)}', space=vmem, size = 0x9000, scoped, tag = 'internal scratch']
  %s0 = inlined_call_operand.hbm [shape: f32[2,4,32], index: 0, kind: input, shape index: {}]
  %s1 = inlined_call_operand.vmem [shape: f32[4,1], index: 1, kind: input, shape index: {}]
  %s2 = inlined_call_operand.hbm [shape: f32[2,32,256], index: 2, kind: input, shape index: {}]
  %s3 = inlined_call_operand.hbm [shape: f32[2,4,256], index: 3, kind: output, shape index: {}]
  %s4 = sld [smem:[#allocation0]]
  $region53: #{tpu_custom_call.1} parent=0
    _
  %s6 = ssub.s32 1, %s4
  %s7 = scalar_select 0, %s6, %s4
  $region1: #{tpu_custom_call.1} parent=0
    #allocation2 [shape = 'u8[4096]{0}', space=vmem, size = 0x1000, scoped, tag = 'input window, operand 0']
    #allocation3 [shape = 's32[2]{0}', space=sflag, size = 0x8, scoped, tag = 'scoped memory for tpu_custom_call.1']
    #allocation4 [shape = 's32[2]{0}', space=sflag, size = 0x8, scoped, tag = 'scoped memory for tpu_custom_call.1']
    #allocation5 [shape = 'u8[65536]{0}', space=vmem, size = 0x10000, scoped, tag = 'input window, operand 2']
    #allocation6 [shape = 's32[2]{0}', space=sflag, size = 0x8, scoped, tag = 'scoped memory for tpu_custom_call.1']
    #allocation7 [shape = 'u8[8192]{0}', space=vmem, size = 0x2000, scoped, tag = 'output window, operand 0']
    %8 = vsyncpa [#allocation3], 0
    %s9 = scalar_lea.sflag [#allocation3], 1
    %10 = vsyncpa %s9, 0
    %11 = vsyncpa [#allocation6], 0
    %s12 = scalar_lea.sflag [#allocation6], 1
    %13 = vsyncpa %s12, 0
    %14 = vsyncpa [#allocation4], 0
    %s15 = scalar_lea.sflag [#allocation4], 1
    %16 = vsyncpa %s15, 0
    loop: start=0, step=1, limit=4
    $region2: #{tpu_custom_call.1} parent=1 // loop_pre_header
      _
    $region3: #{tpu_custom_call.1} parent=1 // loop_header
      %s18 = sphi 0, %s22
      %p19 = scmp.ge.s32.totalorder %s18, 4
      %s25 = sphi 0, %s37
      %s26 = sphi 0, %s33
      %s27 = sphi 0, %s25
      %s28 = sphi 0, %s26
      %s29 = sphi 0, %s27
      %s30 = sphi 0, %s28
      %s40 = sphi 0, %s42
      %s43 = sphi 0, %s40
      %s44 = sphi 0, %s43
      %s60 = sphi 0, %s44
      %s64 = sphi 0, %s64
      %s66 = sphi 0, %s64
      %s67 = sphi 0, %s66
      %s81 = sphi 0, %s67
      %s89 = sphi 0, %s91
      %s92 = sphi 0, %s89
      %s93 = sphi 0, %s92
      %s109 = sphi 0, %s93
      %s117 = sphi 0, %s119
      %s120 = sphi 0, %s117
      %s121 = sphi 0, %s120
      %s137 = sphi 0, %s121
    $region4: #{tpu_custom_call.1} parent=1 // loop_header_branch
      %21 = sbr.rel (%p19) target = $region8
    $region5: #{tpu_custom_call.1} parent=1 // loop_body
      %s23 = ssub.s32 %s18, 1
      %s24 = ssub.s32 %s18, 2
      %s31 = sadd.s32 1, %s26
      %p32 = scmp.ge.s32.totalorder %s31, 1
      %s33 = scalar_select %p32, 0, %s31
      %s34 = sadd.s32 1, %s25
      %s35 = scalar_select %p32, %s34, %s25
      %p36 = scmp.ge.s32.totalorder %s35, 2
      %s37 = scalar_select %p36, 0, %s35
      %s38 = ssub.s32 %s25, %s37
      %p39 = scmp.eq.s32.totalorder %s38, 0
      %s41 = sadd.s32 %s40, 1
      %s42 = scalar_select %p39, %s40, %s41
      %p45 = pneg %p39
      %p46 = scmp.eq.s32.totalorder %s18, 1
      %p47 = por %p45, %p46
      %p48 = scmp.ne.s32.totalorder %s40, %s43
      %p49 = scmp.eq.s32.totalorder %s18, 0
      %p50 = por %p48, %p49
      %p51 = scmp.ne.s32.totalorder %s40, %s43
      %p52 = scmp.eq.s32.totalorder %s23, 1
      %p53 = por %p51, %p52
      %p54 = scmp.ne.s32.totalorder %s43, %s44
      %p55 = scmp.eq.s32.totalorder %s23, 0
      %p56 = por %p54, %p55
      %p57 = scmp.ne.s32.totalorder %s43, %s44
      %p58 = scmp.eq.s32.totalorder %s24, 1
      %p59 = por %p57, %p58
      %p61 = scmp.ne.s32.totalorder %s44, %s60
      %p62 = scmp.eq.s32.totalorder %s24, 0
      %p63 = por %p61, %p62
      %s65 = sadd.s32 %s64, 1
      %p68 = scmp.eq.s32.totalorder %s18, 1
      %p69 = scmp.ne.s32.totalorder %s64, %s66
      %p70 = scmp.eq.s32.totalorder %s18, 0
      %p71 = por %p69, %p70
      %p72 = scmp.ne.s32.totalorder %s64, %s66
      %p73 = scmp.eq.s32.totalorder %s23, 1
      %p74 = por %p72, %p73
      %p75 = scmp.ne.s32.totalorder %s66, %s67
      %p76 = scmp.eq.s32.totalorder %s23, 0
      %p77 = por %p75, %p76
      %p78 = scmp.ne.s32.totalorder %s66, %s67
      %p79 = scmp.eq.s32.totalorder %s24, 1
      %p80 = por %p78, %p79
      %p82 = scmp.ne.s32.totalorder %s67, %s81
      %p83 = scmp.eq.s32.totalorder %s24, 0
      %p84 = por %p82, %p83
      %s85 = ssub.s32 %s25, %s37
      %s86 = ssub.s32 %s26, %s33
      %s87 = sor.u32 %s85, %s86
      %p88 = scmp.eq.s32.totalorder %s87, 0
      %s90 = sadd.s32 %s89, 1
      %s91 = scalar_select %p88, %s89, %s90
      %p94 = pneg %p88
      %p95 = scmp.eq.s32.totalorder %s18, 1
      %p96 = por %p94, %p95
      %p97 = scmp.ne.s32.totalorder %s89, %s92
      %p98 = scmp.eq.s32.totalorder %s18, 0
      %p99 = por %p97, %p98
      %p100 = scmp.ne.s32.totalorder %s89, %s92
      %p101 = scmp.eq.s32.totalorder %s23, 1
      %p102 = por %p100, %p101
      %p103 = scmp.ne.s32.totalorder %s92, %s93
      %p104 = scmp.eq.s32.totalorder %s23, 0
      %p105 = por %p103, %p104
      %p106 = scmp.ne.s32.totalorder %s92, %s93
      %p107 = scmp.eq.s32.totalorder %s24, 1
      %p108 = por %p106, %p107
      %p110 = scmp.ne.s32.totalorder %s93, %s109
      %p111 = scmp.eq.s32.totalorder %s24, 0
      %p112 = por %p110, %p111
      %s113 = ssub.s32 %s25, %s37
      %s114 = ssub.s32 %s26, %s33
      %s115 = sor.u32 %s113, %s114
      %p116 = scmp.eq.s32.totalorder %s115, 0
      %s118 = sadd.s32 %s117, 1
      %s119 = scalar_select %p116, %s117, %s118
      %p122 = pneg %p116
      %p123 = scmp.eq.s32.totalorder %s18, 1
      %p124 = por %p122, %p123
      %p125 = scmp.ne.s32.totalorder %s117, %s120
      %p126 = scmp.eq.s32.totalorder %s18, 0
      %p127 = por %p125, %p126
      %p128 = scmp.ne.s32.totalorder %s117, %s120
      %p129 = scmp.eq.s32.totalorder %s23, 1
      %p130 = por %p128, %p129
      %p131 = scmp.ne.s32.totalorder %s120, %s121
      %p132 = scmp.eq.s32.totalorder %s23, 0
      %p133 = por %p131, %p132
      %p134 = scmp.ne.s32.totalorder %s120, %s121
      %p135 = scmp.eq.s32.totalorder %s24, 1
      %p136 = por %p134, %p135
      %p138 = scmp.ne.s32.totalorder %s121, %s137
      %p139 = scmp.eq.s32.totalorder %s24, 0
      %p140 = por %p138, %p139
      %p141 = scmp.le.s32.totalorder 1, %s18
      %p142 = scmp.lt.s32.totalorder %s18, 3
      %p143 = pnand %p141, %p142
      %p144 = pneg %p143
      // Predicated region
      $region9: #{tpu_custom_call.1} parent=5 // pred_check
        _
      $region10: #{tpu_custom_call.1} parent=5 // pred_check_branch
        %146 = sbr.rel (%p143) target = $region12
      $region11: #{tpu_custom_call.1} parent=5 // pred_region
        %s147 = ssub.s32 %s18, 1
        // Predicated region
        $region13: #{tpu_custom_call.1} parent=11 // pred_check
          %p148 = pneg %p77
        $region14: #{tpu_custom_call.1} parent=11 // pred_check_branch
          %150 = sbr.rel (%p148) target = $region16
        $region15: #{tpu_custom_call.1} parent=11 // pred_region
          _
        $region16: #{tpu_custom_call.1} parent=11 // pred_fallthru
          _
      $region12: #{tpu_custom_call.1} parent=5 // pred_fallthru
        _
      %p151 = scmp.lt.s32.totalorder %s18, 2
      // Predicated region
      $region17: #{tpu_custom_call.1} parent=5 // pred_check
        %p152 = pneg %p151
      $region18: #{tpu_custom_call.1} parent=5 // pred_check_branch
        %154 = sbr.rel (%p152) target = $region20
      $region19: #{tpu_custom_call.1} parent=5 // pred_region
        // Predicated region
        $region21: #{tpu_custom_call.1} parent=19 // pred_check
          %p155 = pneg %p50
        $region22: #{tpu_custom_call.1} parent=19 // pred_check_branch
          %157 = sbr.rel (%p155) target = $region24
        $region23: #{tpu_custom_call.1} parent=19 // pred_region
          %s158 = sand.u32 %s40, 1
          %s159 = scalar_lea.sflag [#allocation3], %s158
          %s160 = sand.u32 %s40, 1
          %s161 = smul.addr %s160, 4
          %s162 = scalar_lea.vmem [#allocation2], %s161
          %164 = vsyncadd %s159, 0
          %s165 = smul.addr %s25, 4
          %s166 = scalar_lea.hbm %s0, %s165
          %s168 = sshll.u32 %s166, 4
          %s169 = int_to_ptr.hbm [resolvable:$true] %s168
          %s170 = sshll.u32 %s162, 4
          %s171 = int_to_ptr.vmem [resolvable:$true] %s170
          %173 = dma.hbm_to_vmem [thread:$0]  %s169, 64, %s171, %s159
        $region24: #{tpu_custom_call.1} parent=19 // pred_fallthru
          _
        // Predicated region
        $region25: #{tpu_custom_call.1} parent=19 // pred_check
          %p174 = pneg %p99
        $region26: #{tpu_custom_call.1} parent=19 // pred_check_branch
          %176 = sbr.rel (%p174) target = $region28
        $region27: #{tpu_custom_call.1} parent=19 // pred_region
          %s177 = sand.u32 %s89, 1
          %s178 = scalar_lea.sflag [#allocation6], %s177
          %s179 = sand.u32 %s89, 1
          %s180 = smul.addr %s179, 64
          %s181 = scalar_lea.vmem [#allocation5], %s180
          %s182 = smul.u32 2, %s26
          %184 = vsyncadd %s178, 0
          %s185 = smul.addr %s25, 8
          %s186 = sadd.s32 %s182, %s185
          %s187 = smul.addr %s186, 8
          %s188 = scalar_lea.hbm %s2, %s187
          %s189 = sshll.u32 %s188, 4
          %s190 = int_to_ptr.hbm [resolvable:$true] %s189
          %s191 = sshll.u32 %s181, 4
          %s192 = int_to_ptr.vmem [resolvable:$true] %s191
          %197 = dma.hbm_to_vmem [thread:$0]  %s190, 1024, %s192, %s178, 256, 256, 16
        $region28: #{tpu_custom_call.1} parent=19 // pred_fallthru
          _
      $region20: #{tpu_custom_call.1} parent=5 // pred_fallthru
        _
      %p198 = scmp.le.s32.totalorder 1, %s18
      %p199 = scmp.lt.s32.totalorder %s18, 3
      %p200 = pnand %p198, %p199
      %p201 = pneg %p200
      // Predicated region
      $region29: #{tpu_custom_call.1} parent=5 // pred_check
        _
      $region30: #{tpu_custom_call.1} parent=5 // pred_check_branch
        %203 = sbr.rel (%p200) target = $region32
      $region31: #{tpu_custom_call.1} parent=5 // pred_region
        %s204 = ssub.s32 %s18, 1
        %s205 = sand.u32 %s43, 1
        %s206 = scalar_lea.sflag [#allocation3], %s205
        %s207 = sand.u32 %s43, 1
        %s208 = smul.addr %s207, 4
        %s209 = scalar_lea.vmem [#allocation2], %s208
        // Predicated region
        $region33: #{tpu_custom_call.1} parent=31 // pred_check
          %p210 = pneg %p56
        $region34: #{tpu_custom_call.1} parent=31 // pred_check_branch
          %212 = sbr.rel (%p210) target = $region36
        $region35: #{tpu_custom_call.1} parent=31 // pred_region
          %214 = dma.done %s206, 64
        $region36: #{tpu_custom_call.1} parent=31 // pred_fallthru
          _
        %s215 = sand.u32 %s92, 1
        %s216 = scalar_lea.sflag [#allocation6], %s215
        %s217 = sand.u32 %s92, 1
        %s218 = smul.addr %s217, 64
        %s219 = scalar_lea.vmem [#allocation5], %s218
        // Predicated region
        $region37: #{tpu_custom_call.1} parent=31 // pred_check
          %p220 = pneg %p105
        $region38: #{tpu_custom_call.1} parent=31 // pred_check_branch
          %222 = sbr.rel (%p220) target = $region40
        $region39: #{tpu_custom_call.1} parent=31 // pred_region
          %224 = dma.done %s216, 1024
        $region40: #{tpu_custom_call.1} parent=31 // pred_fallthru
          _
        %s225 = sand.u32 %s43, 1
        %s226 = scalar_lea.sflag [#allocation3], %s225
        %s227 = sand.u32 %s43, 1
        %s228 = smul.addr %s227, 4
        %s229 = scalar_lea.vmem [#allocation2], %s228
        %p230 = pneg %p56
        %p231 = pneg %p53
        %p232 = pneg %p77
        %p233 = pneg %p74
        %s234 = sand.u32 %s92, 1
        %s235 = scalar_lea.sflag [#allocation6], %s234
        %s236 = sand.u32 %s92, 1
        %s237 = smul.addr %s236, 64
        %s238 = scalar_lea.vmem [#allocation5], %s237
        %p239 = pneg %p105
        %p240 = pneg %p102
        %p241 = pneg %p133
        %p242 = pneg %p130
        %s243 = sand.u32 %s120, 1
        %s244 = scalar_lea.sflag [#allocation4], %s243
        %s245 = sand.u32 %s120, 1
        %s246 = smul.addr %s245, 8
        %s247 = scalar_lea.vmem [#allocation7], %s246
        %s248 = smul.u32 2, %s28
        %s249 = smul.u32 2, %s28
        %v250 = vld [vmem:[%s209] sm:$0xf]
        %v251 = vld [vmem:[%s219] sm:$0xff]
        %v252 = vld [vmem:[%s219 + $0x8] sm:$0xff]
        %v253 = vld [vmem:[%s219 + $0x10] sm:$0xff]
        %v254 = vld [vmem:[%s219 + $0x18] sm:$0xff]
        %v255 = vld [vmem:[%s219 + $0x20] sm:$0xff]
        %v256 = vld [vmem:[%s219 + $0x28] sm:$0xff]
        %v257 = vld [vmem:[%s219 + $0x30] sm:$0xff]
        %v258 = vld [vmem:[%s219 + $0x38] sm:$0xff]
        %v259 = vld [vmem:[%s1] sm:$0xf]
        %261 = vset.pattern.permute.xlu0 0
        %262 = vperm.xlu0 %261, %v259
        %v263 = vpop.permute.xlu0 %262
        %vm265 = vcmask 261120
        %v267 = vsel %vm265, %v250, 0
        %269 = vmatpush.msra.mxu0 0.0
        %270 = vmatpush.msra.mxu0 0.0
        %271 = vmatpush.msra.mxu0 0.0
        %272 = vmatpush.msra.mxu0 0.0
        %273 = vmatpush.msra.mxu0 0.0
        %274 = vmatpush.msra.mxu0 0.0
        %275 = vmatpush.msra.mxu0 0.0
        %276 = vmatpush.msra.mxu0 0.0
        %277 = vmatpush.msra.mxu0 0.0
        %278 = vmatpush.msra.mxu0 0.0
        %279 = vmatpush.msra.mxu0 0.0
        %280 = vmatpush.msra.mxu0 0.0
        %281 = vmatpush.msra.mxu0 %v257
        %282 = vmatpush.msra.mxu0 %v255
        %283 = vmatpush.msra.mxu0 %v253
        %284 = vmatpush.msra.mxu0 %v251
        %285 = vmatmul.f32.gmra.mxu0 %v267
        %v286 = vpop.f32.mrf.mxu0
        %v287 = vadd.f32 %v263, %v286
        %288 = vdwg.mxu0
        %289 = vmatpush.msra.mxu0 0.0
        %290 = vmatpush.msra.mxu0 0.0
        %291 = vmatpush.msra.mxu0 0.0
        %292 = vmatpush.msra.mxu0 0.0
        %293 = vmatpush.msra.mxu0 0.0
        %294 = vmatpush.msra.mxu0 0.0
        %295 = vmatpush.msra.mxu0 0.0
        %296 = vmatpush.msra.mxu0 0.0
        %297 = vmatpush.msra.mxu0 0.0
        %298 = vmatpush.msra.mxu0 0.0
        %299 = vmatpush.msra.mxu0 0.0
        %300 = vmatpush.msra.mxu0 0.0
        %301 = vmatpush.msra.mxu0 %v258
        %302 = vmatpush.msra.mxu0 %v256
        %303 = vmatpush.msra.mxu0 %v254
        %304 = vmatpush.msra.mxu0 %v252
        %305 = vmatmul.f32.gmra.mxu0 %v267
        %v306 = vpop.f32.mrf.mxu0
        %v307 = vadd.f32 %v263, %v306
        %308 = vdwg.mxu0
        %v311 = vrot.slane %v307, 4
        %vm312 = vcmask 1043456
        %v313 = vsel %vm312, %v287, %v311
        %315 = vst [vmem:[%s247] sm:$0xff] %v313
        %s316 = sand.u32 %s120, 1
        %s317 = scalar_lea.sflag [#allocation4], %s316
        %s318 = sand.u32 %s120, 1
        %s319 = smul.addr %s318, 8
        %s320 = scalar_lea.vmem [#allocation7], %s319
        // Predicated region
        $region41: #{tpu_custom_call.1} parent=31 // pred_check
          %p321 = pneg %p130
        $region42: #{tpu_custom_call.1} parent=31 // pred_check_branch
          %323 = sbr.rel (%p321) target = $region44
        $region43: #{tpu_custom_call.1} parent=31 // pred_region
          %s324 = smul.u32 2, %s28
          %326 = vsyncadd %s317, 0
          %s327 = smul.addr %s27, 2
          %s328 = sadd.s32 %s324, %s327
          %s329 = smul.addr %s328, 4
          %s330 = scalar_lea.hbm %s3, %s329
          %s332 = sshll.u32 %s320, 4
          %s333 = int_to_ptr.vmem [resolvable:$true] %s332
          %s334 = sshll.u32 %s330, 4
          %s335 = int_to_ptr.hbm [resolvable:$true] %s334
          %337 = dma.vmem_to_hbm [thread:$0]  %s333, 128, %s335, %s317
        $region44: #{tpu_custom_call.1} parent=31 // pred_fallthru
          _
      $region32: #{tpu_custom_call.1} parent=5 // pred_fallthru
        _
      %p338 = scmp.le.s32.totalorder 2, %s18
      // Predicated region
      $region45: #{tpu_custom_call.1} parent=5 // pred_check
        %p339 = pneg %p338
      $region46: #{tpu_custom_call.1} parent=5 // pred_check_branch
        %341 = sbr.rel (%p339) target = $region48
      $region47: #{tpu_custom_call.1} parent=5 // pred_region
        %s342 = ssub.s32 %s18, 2
        // Predicated region
        $region49: #{tpu_custom_call.1} parent=47 // pred_check
          %p343 = pneg %p136
        $region50: #{tpu_custom_call.1} parent=47 // pred_check_branch
          %345 = sbr.rel (%p343) target = $region52
        $region51: #{tpu_custom_call.1} parent=47 // pred_region
          %s346 = sand.u32 %s121, 1
          %s347 = scalar_lea.sflag [#allocation4], %s346
          %s348 = sand.u32 %s121, 1
          %s349 = smul.addr %s348, 8
          %s350 = scalar_lea.vmem [#allocation7], %s349
          %352 = dma.done %s347, 128
        $region52: #{tpu_custom_call.1} parent=47 // pred_fallthru
          _
      $region48: #{tpu_custom_call.1} parent=5 // pred_fallthru
        _
    $region6: #{tpu_custom_call.1} parent=1 // loop_footer
      %s22 = sadd.s32 1, %s18
    $region7: #{tpu_custom_call.1} parent=1 // loop_footer_branch
      %17 = sbr.rel target = $region3
    $region8: #{tpu_custom_call.1} parent=1 // loop_exit
      _
    %353 = vsyncpa [#allocation3], 1
    %s354 = scalar_lea.sflag [#allocation3], 1
    %355 = vsyncpa %s354, 1
    %356 = vsyncpa [#allocation6], 1
    %s357 = scalar_lea.sflag [#allocation6], 1
    %358 = vsyncpa %s357, 1
    %359 = vsyncpa [#allocation4], 1
    %s360 = scalar_lea.sflag [#allocation4], 1
    %361 = vsyncpa %s360, 1

</llo_original>
